<compile_context>
chip_gen: v7x
topology: tpu7x:2x2x1
jax: 0.10.0
libtpu: 0.0.40
codegen_flags: <defaults>
</compile_context>

<pallas_src>
import math

import jax
import jax.numpy as jnp
from jax.experimental import pallas as pl
from jax.experimental.pallas import tpu as pltpu


def _round_up(x: int, m: int) -> int:
    return ((x + m - 1) // m) * m


def _pos_emb_kernel(t_ref, w_ref, o_ref):
    # t_ref: (TILE_B, 1) f32          batch on sublanes, singleton lane
    # w_ref: (1, OUT_DIM) f32         resident weight row  [ 0 | w | w ]
    # o_ref: (TILE_B, OUT_DIM) f32    final layout [ t | sin | cos ]
    out_dim = w_ref.shape[1]
    half_dim = (out_dim - 1) // 2

    t = t_ref[...]                                    # (TILE_B, 1)
    w = w_ref[...]                                    # (1, OUT_DIM)
    freqs = t * w * (2.0 * math.pi)                   # (TILE_B, OUT_DIM), VPU broadcast

    lane = jax.lax.broadcasted_iota(jnp.int32, freqs.shape, dimension=1)
    # cos(x) = sin(x + pi/2): one transcendental pass over the whole row.
    phase = jnp.where(lane > half_dim, jnp.float32(0.5 * math.pi), jnp.float32(0.0))
    fouriered = jnp.sin(freqs + phase)                # EUP; select below is free VPU work
    o_ref[...] = jnp.where(lane == 0, t, fouriered)   # lane 0 carries `times`


def _choose_tile_b(B: int, out_dim: int) -> int:
    # Keep each output buffer <= ~4 MiB (conservative for v7x scoped VMEM /
    # double-buffering) and <= 2048 rows; prefer >= 2 balanced tiles for
    # mid-size B so a "parallel" grid axis can shard across v7x's 2 TCs.
    bytes_per_row = out_dim * 4
    cap = min(2048, max(8, ((4 << 20) // bytes_per_row) // 8 * 8))
    if B <= 256:
        tile = _round_up(B, 8)                # single (or few) tile(s)
    elif B <= 2 * cap:
        tile = _round_up(-(-B // 2), 8)       # two balanced tiles
    else:
        n_tiles = -(-B // cap)
        tile = _round_up(-(-B // n_tiles), 8)  # balanced tiles, each <= cap
    return min(tile, cap)


def _reference(times: jax.Array, weights: jax.Array) -> jax.Array:
    t = times[..., None].astype(jnp.float32)
    freqs = t * weights.astype(jnp.float32) * (2.0 * math.pi)
    return jnp.concatenate([t, jnp.sin(freqs), jnp.cos(freqs)], axis=-1)


def stable_audio_positional_embedding(
    times: jax.Array, weights: jax.Array, *, use_pallas: bool | None = None
) -> jax.Array:
    """times: (...,) float; weights: (half_dim,) float -> (..., 2*half_dim + 1) f32."""
    assert weights.ndim == 1
    half_dim = int(weights.shape[0])
    out_dim = 2 * half_dim + 1

    orig_shape = times.shape
    t_flat = times.reshape(-1).astype(jnp.float32)
    B = int(t_flat.shape[0])

    # Fast path: at tiny sizes (the common diffusion-timestep regime) a fused
    # XLA expression beats any kernel launch.
    if use_pallas is None:
        use_pallas = B * out_dim >= (64 * 1024)
    if not use_pallas:
        return _reference(times, weights)

    t_col = t_flat[:, None]                                        # (B, 1)
    w32 = weights.astype(jnp.float32)
    # Weight row matching the final output layout: [ 0 | w (sin) | w (cos) ].
    w_row = jnp.concatenate([jnp.zeros((1,), jnp.float32), w32, w32])[None, :]

    tile_b = _choose_tile_b(B, out_dim)
    grid = (pl.cdiv(B, tile_b),)                                    # ragged tail masked

    out = pl.pallas_call(
        _pos_emb_kernel,
        out_shape=jax.ShapeDtypeStruct((B, out_dim), jnp.float32),
        grid=grid,
        in_specs=[
            pl.BlockSpec((tile_b, 1), lambda i: (i, 0)),            # times tile
            pl.BlockSpec((1, out_dim), lambda i: (0, 0)),           # weights resident
        ],
        # NOTE: if profiling shows exposed writeback on v5e, sweep
        # pipeline_mode=pl.Buffered(3) on this out spec.
        out_specs=pl.BlockSpec((tile_b, out_dim), lambda i: (i, 0)),
        compiler_params=pltpu.CompilerParams(
            dimension_semantics=("parallel",),
        ),
    )(t_col, w_row)

    return out.reshape(*orig_shape, out_dim)


if __name__ == "__main__":
    key = jax.random.PRNGKey(0)
    k_w, k_t = jax.random.split(key)

    dim = 32                          # embedding dim (must be even)
    half_dim = dim // 2
    batch = 8

    # Deterministic init mirroring nn.Parameter(torch.randn(half_dim)).
    weights = jax.random.normal(k_w, (half_dim,), dtype=jnp.float32)
    # Continuous times in [0, 1).
    times = jax.random.uniform(k_t, (batch,), dtype=jnp.float32)

    ref = _reference(times, weights)

    # Force the Pallas path so the kernel itself is exercised at this size
    # (the auto path would take the fused-XLA fast path here).
    out = jax.block_until_ready(
        stable_audio_positional_embedding(times, weights, use_pallas=True)
    )
    assert out.shape == (batch, dim + 1), out.shape
    assert float(jnp.max(jnp.abs(out - ref))) < 1e-4, "mismatch vs reference (kernel)"

    # Auto path (fast path at this tiny size) sanity check.
    out_auto = jax.block_until_ready(stable_audio_positional_embedding(times, weights))
    assert float(jnp.max(jnp.abs(out_auto - ref))) < 1e-4, "mismatch (fast path)"

    # Larger, non-multiple batch through the kernel: exercises balanced 2-way
    # tiling and the masked ragged tail block.
    big_times = jax.random.uniform(jax.random.PRNGKey(1), (1037,), dtype=jnp.float32)
    big_out = jax.block_until_ready(
        stable_audio_positional_embedding(big_times, weights, use_pallas=True)
    )
    big_ref = _reference(big_times, weights)
    assert big_out.shape == (1037, dim + 1), big_out.shape
    assert float(jnp.max(jnp.abs(big_out - big_ref))) < 1e-4, "mismatch (large B)"

    print("KERNEL_OK")
</pallas_src>

<mosaic_0001>
module attributes {stable_mosaic.version = 11 : i64} {
  func.func @_pos_emb_kernel(%arg0: i32, %arg1: memref<8x1xf32, #tpu.memory_space<vmem>>, %arg2: memref<1x33xf32, #tpu.memory_space<vmem>>, %arg3: memref<8x33xf32, #tpu.memory_space<vmem>>) attributes {dimension_semantics = [#tpu.dimension_semantics<parallel>], iteration_bounds = array<i64: 1>, scalar_prefetch = 0 : i64, scratch_operands = 0 : i64, tpu.core_type = #tpu.core_type<tc>, window_params = [{transform_indices = @transform_0, window_bounds = array<i64: 8, 1>}, {pipeline_mode = #tpu.pipeline_mode<synchronous>, transform_indices = @transform_1, window_bounds = array<i64: 1, 33>}, {transform_indices = @transform_2, window_bounds = array<i64: 8, 33>}]} {
    %c0 = arith.constant 0 : index
    %c0_0 = arith.constant 0 : index
    %0 = vector.load %arg1[%c0, %c0_0] : memref<8x1xf32, #tpu.memory_space<vmem>>, vector<8x1xf32>
    %c0_1 = arith.constant 0 : index
    %c0_2 = arith.constant 0 : index
    %1 = vector.load %arg2[%c0_1, %c0_2] : memref<1x33xf32, #tpu.memory_space<vmem>>, vector<1x33xf32>
    %2 = vector.broadcast %0 : vector<8x1xf32> to vector<8x33xf32>
    %3 = vector.broadcast %1 : vector<1x33xf32> to vector<8x33xf32>
    %4 = arith.mulf %2, %3 : vector<8x33xf32>
    %cst = arith.constant 6.28318548 : f32
    %5 = vector.broadcast %cst : f32 to vector<8x33xf32>
    %6 = arith.mulf %4, %5 : vector<8x33xf32>
    %7 = tpu.iota {dimensions = array<i32: 1>} : vector<8x33xi32>
    %c16_i32 = arith.constant 16 : i32
    %8 = vector.broadcast %c16_i32 : i32 to vector<8x33xi32>
    %9 = arith.cmpi sgt, %7, %8 : vector<8x33xi32>
    %cst_3 = arith.constant 1.57079637 : f32
    %cst_4 = arith.constant 0.000000e+00 : f32
    %10 = vector.broadcast %cst_3 : f32 to vector<8x33xf32>
    %11 = vector.broadcast %cst_4 : f32 to vector<8x33xf32>
    %12 = arith.select %9, %10, %11 : vector<8x33xi1>, vector<8x33xf32>
    %13 = arith.addf %6, %12 : vector<8x33xf32>
    %14 = math.sin %13 : vector<8x33xf32>
    %c0_i32 = arith.constant 0 : i32
    %15 = vector.broadcast %c0_i32 : i32 to vector<8x33xi32>
    %16 = arith.cmpi eq, %7, %15 : vector<8x33xi32>
    %17 = vector.shape_cast %0 : vector<8x1xf32> to vector<8x1xf32>
    %18 = vector.broadcast %17 : vector<8x1xf32> to vector<8x33xf32>
    %19 = arith.select %16, %18, %14 : vector<8x33xi1>, vector<8x33xf32>
    %c0_5 = arith.constant 0 : index
    %c0_6 = arith.constant 0 : index
    %20 = vector.load %arg3[%c0_5, %c0_6] : memref<8x33xf32, #tpu.memory_space<vmem>>, vector<8x33xf32>
    tpu.vector_store %arg3[%c0_5, %c0_6], %19 {strides = array<i32>} : memref<8x33xf32, #tpu.memory_space<vmem>>, vector<8x33xf32>,
    return
  }
  func.func @transform_0(%arg0: i32) -> (i32, i32) {
    %c0_i32 = arith.constant 0 : i32
    %c0_i32_0 = arith.constant 0 : i32
    return %arg0, %c0_i32 : i32, i32
  }
  func.func @transform_1(%arg0: i32) -> (i32, i32) {
    %c0_i32 = arith.constant 0 : i32
    %c0_i32_0 = arith.constant 0 : i32
    %c0_i32_1 = arith.constant 0 : i32
    return %c0_i32, %c0_i32_0 : i32, i32
  }
  func.func @transform_2(%arg0: i32) -> (i32, i32) {
    %c0_i32 = arith.constant 0 : i32
    %c0_i32_0 = arith.constant 0 : i32
    return %arg0, %c0_i32 : i32, i32
  }
}

</mosaic_0001>

<llo_original>
// kernel: tpu_custom_call.1
$region0: #{tpu_custom_call.1}
  #allocation0 [shape = 'u32[]', space=smem, size = 0x4, offset = 0x4, fixed_abs, tag = 'smem constant byte address 0x4 - core index']
  #allocation1 [shape = 'u32[144,128]{1,0:T(1,128)}', space=vmem, size = 0x12000, scoped, tag = 'internal scratch']
  %s0 = inlined_call_operand.vmem [shape: f32[8,1], index: 0, kind: input, shape index: {}]
  %s1 = inlined_call_operand.vmem [shape: f32[1,33], index: 1, kind: input, shape index: {}]
  %s2 = inlined_call_operand.hbm [shape: f32[8,33], index: 2, kind: output, shape index: {}]
  %s3 = sld [smem:[#allocation0]]
  $region18: #{tpu_custom_call.1} parent=0
    _
  %s5 = ssub.s32 1, %s3
  %s6 = scalar_select 0, %s5, %s3
  $region1: #{tpu_custom_call.1} parent=0
    #allocation2 [shape = 'u8[4096]{0}', space=vmem, size = 0x1000, scoped, tag = 'output window, operand 0, single buffered']
    #allocation3 [shape = 's32[1]{0}', space=sflag, size = 0x4, scoped, tag = 'scoped memory for tpu_custom_call.1']
    %7 = vsyncpa [#allocation3], 0
    // Predicated region
    $region2: #{tpu_custom_call.1} parent=1 // pred_check
      _
    $region3: #{tpu_custom_call.1} parent=1 // pred_check_branch
      %9 = sbr.rel (0) target = $region5
    $region4: #{tpu_custom_call.1} parent=1 // pred_region
      _
    $region5: #{tpu_custom_call.1} parent=1 // pred_fallthru
      _
    // Predicated region
    $region6: #{tpu_custom_call.1} parent=1 // pred_check
      _
    $region7: #{tpu_custom_call.1} parent=1 // pred_check_branch
      %11 = sbr.rel (0) target = $region9
    $region8: #{tpu_custom_call.1} parent=1 // pred_region
      _
    $region9: #{tpu_custom_call.1} parent=1 // pred_fallthru
      _
    %v12 = vld [vmem:[%s0] sm:$0xff]
    %v13 = vld [vmem:[%s1] sm:$0x1]
    %15 = vset.pattern.permute.xlu0 0
    %16 = vperm.xlu0 %15, %v12
    %v17 = vpop.permute.xlu0 %16
    %v20 = vlaneseq
    %v21 = vshrl.u32 %v20, 7
    %v22 = vsub.s32 0, %v21
    %v23 = vrot.slane %v13, %v22
    %v25 = vmul.f32 %v17, %v23
    %v26 = vmul.f32 %v25, 6.2831855
    %v27 = vlaneseq
    %v28 = vand.u32 %v27, 127
    %vm29 = vcmp.gt.s32.totalorder %v28, 16
    %v30 = vsel %vm29, 1.5707964, 0.0
    %v31 = vadd.f32 %v26, %v30
    %v32 = vand.u32 2147483647, %v31
    %vm33 = vcmp.le.f32.partialorder %v32, 0.7853982
    %vm34 = vcmp.lt.s32.totalorder %v31, 0
    %v35 = vand.u32 %v31, 2139095040
    %v36 = vshrl.u32 %v35, 23
    %v37 = vsub.s32 %v36, 127
    %v38 = vand.u32 2147483647, %v31
    %v39 = vand.u32 %v38, 8388607
    %v40 = vor.u32 %v39, 8388608
    %v41 = vsub.s32 0, %v40
    %v42 = vadd.s32 %v37, 1
    %vm43 = vcmp.gt.s32.totalorder %v42, 0
    %v44 = vsel %vm43, %v42, 0
    %v45 = vshrl.u32 %v44, 5
    %v46 = vand.u32 %v44, 31
    %v47 = vsub.s32 32, %v46
    %v48 = vshrl.u32 683565275, %v47
    %v49 = vshll.u32 683565275, %v46
    %v50 = vshrl.u32 2475754826, %v47
    %v51 = vor.u32 %v49, %v50
    %v52 = vshll.u32 2475754826, %v46
    %v53 = vshrl.u32 2131351028, %v47
    %v54 = vor.u32 %v52, %v53
    %v55 = vshll.u32 2131351028, %v46
    %v56 = vshrl.u32 2102212464, %v47
    %v57 = vor.u32 %v55, %v56
    %v58 = vshll.u32 2102212464, %v46
    %v59 = vshrl.u32 920167782, %v47
    %v60 = vor.u32 %v58, %v59
    %v61 = vshll.u32 920167782, %v46
    %v62 = vshrl.u32 1326507024, %v47
    %v63 = vor.u32 %v61, %v62
    %vm64 = vcmp.lt.s32.totalorder %v45, 1
    %vm65 = vcmp.lt.s32.totalorder %v45, 2
    %vm66 = vcmp.lt.s32.totalorder %v45, 3
    %vm67 = vcmp.lt.s32.totalorder %v45, 4
    %v68 = vsel %vm64, %v48, %v51
    %v69 = vsel %vm67, %v57, 2102212464
    %v70 = vsel %vm66, %v54, %v69
    %v71 = vsel %vm65, %v68, %v70
    %v72 = vsel %vm64, %v51, %v54
    %v73 = vsel %vm67, %v60, 920167782
    %v74 = vsel %vm66, %v57, %v73
    %v75 = vsel %vm65, %v72, %v74
    %v76 = vsel %vm64, %v54, %v57
    %v77 = vsel %vm67, %v63, 1326507024
    %v78 = vsel %vm66, %v60, %v77
    %v79 = vsel %vm65, %v76, %v78
    %v80 = vshll.u32 %v40, 8
    %v81 = vmul.u32.u64.compose %v80, %v79
    %v82 = vextract.low.u32 %v81
    %v83 = vextract.high.u32 %v81
    %v84 = vmul.u32.u64.compose %v80, %v75
    %v85 = vextract.low.u32 %v84
    %v86 = vextract.high.u32 %v84
    %v87 = vmul.u32 %v80, %v71
    %v88 = vadd.s32 %v83, %v85
    %vm89 = vc.u32 %v83, %v85
    %v90 = vadd.s32 %v86, 1
    %v91 = vsel %vm89, %v90, %v86
    %v92 = vadd.s32 %v87, %v91
    %v93 = vadd.s32 %v92, 536870912
    %v94 = vshrl.u32 %v93, 30
    %v95 = vshll.u32 %v94, 30
    %v96 = vsub.s32 %v92, %v95
    %vm97 = vcmp.lt.s32.totalorder %v96, 0
    %v98 = vsub.s32 0, %v96
    %v99 = vsel %vm97, %v98, %v96
    %v100 = vclz %v99
    %v101 = vsub.s32 %v100, 2
    %vm102 = vcmp.gt.s32.totalorder 0, %v101
    %v103 = vsel %vm102, 0, %v101
    %v104 = vsub.s32 32, %v103
    %v105 = vshll.u32 %v96, %v103
    %v106 = vshrl.u32 %v88, %v104
    %v107 = vor.u32 %v105, %v106
    %v108 = vsub.s32 4294967266, %v103
    %v109 = vadd.s32 %v108, 127
    %v110 = vshll.u32 %v109, 23
    %v111 = vor.u32 4788187, %v110
    %v112 = vand.u32 2147483647, %v111
    %v114 = vcvt.s32.f32 %v107
    %v115 = vmul.f32 %v114, %v112
    %v116 = vxor.u32 %v115, 2147483648
    %v117 = vsel %vm34, %v116, %v115
    %v118 = vsub.s32 4, %v94
    %v119 = vsel %vm34, %v118, %v94
    %v120 = vsel %vm33, %v31, %v117
    %v121 = vsel %vm33, 0, %v119
    %v122 = vcosq.f32.pop %v120
    %v123 = vsinq.f32.pop %v120
    %vm124 = vweird.f32 %v31
    %v125 = vadd.s32 %v121, 3
    %v126 = vand.u32 %v125, 3
    %vm127 = vcmp.lt.s32.totalorder %v126, 2
    %vm128 = vcmp.eq.s32.totalorder %v126, 0
    %v129 = vxor.u32 %v123, 2147483648
    %v130 = vsel %vm128, %v122, %v129
    %vm131 = vcmp.eq.s32.totalorder %v126, 2
    %v132 = vxor.u32 %v122, 2147483648
    %v133 = vsel %vm131, %v132, %v123
    %v134 = vsel %vm127, %v130, %v133
    %v135 = vsel %vm124, nan, %v134
    %vm136 = vcmp.eq.s32.totalorder %v28, 0
    %v137 = vsel %vm136, %v17, %v135
    %vm138 = vcmask 269312
    %139 = vst.msk [vmem:[#allocation2] sm:$0xff] %vm138, %v137
    // Predicated region
    $region10: #{tpu_custom_call.1} parent=1 // pred_check
      _
    $region11: #{tpu_custom_call.1} parent=1 // pred_check_branch
      %141 = sbr.rel (0) target = $region13
    $region12: #{tpu_custom_call.1} parent=1 // pred_region
      %s143 = ssub.s32 128, 128
      %144 = vsyncadd [#allocation3], %s143
      %s146 = sshll.u32 [#allocation2], 4
      %s147 = int_to_ptr.vmem [resolvable:$true] %s146
      %149 = dma.vmem_to_hbm [thread:$0]  %s147, 128, %s2, [#allocation3]
    $region13: #{tpu_custom_call.1} parent=1 // pred_fallthru
      _
    // Predicated region
    $region14: #{tpu_custom_call.1} parent=1 // pred_check
      _
    $region15: #{tpu_custom_call.1} parent=1 // pred_check_branch
      %151 = sbr.rel (0) target = $region17
    $region16: #{tpu_custom_call.1} parent=1 // pred_region
      %152 = dma.done [#allocation3], 128
    $region17: #{tpu_custom_call.1} parent=1 // pred_fallthru
      _
    %153 = vsyncpa [#allocation3], 1

</llo_original>
